<compile_context>
chip_gen: v5e
topology: v5e:2x2
jax: 0.10.0
libtpu: 0.0.40
codegen_flags: <defaults>
</compile_context>

<pallas_src>
import numpy as np
import jax
import jax.numpy as jnp
from jax.experimental import pallas as pl
from jax.experimental.pallas import tpu as pltpu


_LANE = 128          # lane width: last-dim alignment for MXU / unmasked vector stores
_SUBLANE_OUT = 8     # f32 sublane tile; output slab rows so the (8, tb) block is legal


def _fmfm_kernel(x_ref, w_ref, o_ref):
    """One batch tile of the FmFM interaction.

    x_ref: (TB, Np) compute dtype — lane-padded concat of per-field embeddings.
    w_ref: (Np, Np) compute dtype — block-upper-triangular pair weights, resident in
           VMEM for the whole grid (whole-array memory_space=VMEM operand).
    o_ref: (8, TB) f32 — lane-dense output slab; all 8 sublanes carry the same row.
    """
    x = x_ref[...]
    # One wide MXU matmul covers every (i, j) pair at once; accumulate in f32.
    t = jnp.dot(x, w_ref[...], preferred_element_type=jnp.float32)      # (TB, Np) f32
    # Per-row dot with x itself: out[b] = sum_n t[b, n] * x[b, n].
    s = jnp.sum(t * x.astype(jnp.float32), axis=-1)                     # (TB,) f32
    # Lane-dense store: batch lives on the lane axis; broadcasting over the 8
    # sublanes makes the store a full unmasked slab (no vst.msk partial stores).
    o_ref[...] = jnp.broadcast_to(s[None, :], o_ref.shape)


def _choose_batch_tile(B, batch_tile):
    """Pick the batch tile.

    Large tiles amortize the ~0.35us/grid-step overhead and small-DMA inefficiency,
    but we keep >=2 tiles whenever B allows it so that dimension_semantics=
    ("parallel",) can shard the batch axis across v7x's two TensorCores.
    """
    if B >= 2 * batch_tile:
        return batch_tile
    if B >= 2 * _LANE:
        # Split into (at least) two lane-aligned tiles.
        half = pl.cdiv(B, 2)
        return pl.cdiv(half, _LANE) * _LANE
    # Tiny batch: block == full array dim (exempt from the (8,128) rule).
    return B


def fmfm_interaction(x2, w_full, *, batch_tile=512):
    """out[b] = sum_{i<j} e_i(b)^T W_ij e_j(b)  ==  sum((x2 @ W_full) * x2, axis=-1).

    x2:     (B, n)   flattened per-field embeddings in compute dtype (n = F*D <= Np).
    w_full: (Np, Np) block-upper-triangular packed pair weights, lane-padded.
    Returns (B, 1) float32.
    """
    B, n = x2.shape
    Np = w_full.shape[0]
    assert w_full.shape == (Np, Np) and n <= Np

    tb = _choose_batch_tile(B, batch_tile)
    num_tiles = pl.cdiv(B, tb)
    Bp = num_tiles * tb

    # Single combined pad (batch rows -> Bp, lanes -> Np), done once on the
    # compute-dtype activation.  The zeros are load-bearing: zero rows produce zero
    # outputs (sliced off below) and zero lanes only touch zero rows/cols of W_full.
    if Bp != B or n != Np:
        x2 = jnp.pad(x2, ((0, Bp - B), (0, Np - n)))

    # Explicit scoped-VMEM budget with headroom: double-buffered x2 tiles, one
    # resident W, double-buffered output slabs, plus f32 intermediates of the tile.
    item = jnp.dtype(x2.dtype).itemsize
    work_bytes = (2 * tb * Np * item          # x2 blocks (double-buffered)
                  + Np * Np * item            # W_full, single resident copy
                  + 2 * _SUBLANE_OUT * tb * 4  # output slabs (double-buffered)
                  + 3 * tb * Np * 4)          # in-kernel f32 intermediates / spill
    vmem_limit = int(min(max(2 * work_bytes, 32 << 20), 48 << 20))

    out = pl.pallas_call(
        _fmfm_kernel,
        out_shape=jax.ShapeDtypeStruct((_SUBLANE_OUT, Bp), jnp.float32),
        grid_spec=pltpu.PrefetchScalarGridSpec(
            num_scalar_prefetch=0,
            grid=(num_tiles,),
            in_specs=[
                pl.BlockSpec((tb, Np), lambda b: (b, 0)),
                # Whole W stays VMEM-resident for the entire grid: one HBM->VMEM
                # copy, no per-step DMA, no double-buffer for the constant operand.
                pl.BlockSpec(memory_space=pltpu.MemorySpace.VMEM),
            ],
            out_specs=pl.BlockSpec((_SUBLANE_OUT, tb), lambda b: (0, b)),
        ),
        compiler_params=pltpu.CompilerParams(
            dimension_semantics=("parallel",),   # independent batch tiles (v7x megacore)
            vmem_limit_bytes=vmem_limit,
        ),
    )(x2, w_full)
    # Row 0 of the slab holds the per-example results; padded batch rows are dropped.
    return out[0, :B].reshape(B, 1)


class FMFM:
    """JAX/Pallas port of the PyTorch FMFM module ('matrix' interaction type)."""

    def __init__(self, field_dims, embed_dim, key, interaction_type="matrix",
                 compute_dtype=jnp.bfloat16, batch_tile=512):
        assert interaction_type == "matrix", "only 'matrix' type implemented"
        self.field_dims = list(field_dims)
        self.embed_dim = int(embed_dim)
        self.num_field = len(field_dims)
        self.inter_num = self.num_field * (self.num_field - 1) // 2
        self.compute_dtype = compute_dtype
        self.batch_tile = int(batch_tile)

        # FeaturesEmbedding: single table with per-field offsets.
        self.offsets = jnp.asarray(
            np.array((0, *np.cumsum(field_dims)[:-1]), dtype=np.int64), dtype=jnp.int32)
        vocab = int(np.sum(field_dims))

        k1, k2 = jax.random.split(key)
        b_emb = float(np.sqrt(6.0 / (vocab + embed_dim)))
        emb_f32 = jax.random.uniform(
            k1, (vocab, embed_dim), jnp.float32, minval=-b_emb, maxval=b_emb)
        # Store the table directly in the compute dtype so the gather emits bf16 and
        # the wrapper never materializes / re-writes an f32 (B, F*D) activation.
        self.emb_table = emb_f32.astype(compute_dtype)

        b_w = float(np.sqrt(6.0 / (embed_dim + embed_dim)))
        self.interaction_weight = jax.random.uniform(
            k2, (self.inter_num, embed_dim, embed_dim),
            jnp.float32, minval=-b_w, maxval=b_w)

        # Pair enumeration (i < j), kept for the pure-JAX reference.
        row, col = [], []
        for i in range(self.num_field - 1):
            for j in range(i + 1, self.num_field):
                row.append(i)
                col.append(j)
        self.row = jnp.asarray(row, dtype=jnp.int32)
        self.col = jnp.asarray(col, dtype=jnp.int32)

        # Pre-pack all pair matrices into one block-upper-triangular (F*D, F*D)
        # weight, lane-padded so the MXU K/N dims are multiples of 128.
        # (For large F, roughly half of this is structural zero; pruning / block
        # tiling only pays once F*D is big enough to be MXU-bound — not here.)
        F, D = self.num_field, self.embed_dim
        n = F * D
        self.n_pad = pl.cdiv(n, _LANE) * _LANE
        w_full = np.zeros((self.n_pad, self.n_pad), np.float32)
        w_np = np.asarray(self.interaction_weight)
        p = 0
        for i in range(F - 1):
            for j in range(i + 1, F):
                w_full[i * D:(i + 1) * D, j * D:(j + 1) * D] = w_np[p]
                p += 1
        self.w_full = jnp.asarray(w_full, dtype=compute_dtype)

    def __call__(self, x):
        # x: (B, num_field) int32 per-field category indices.
        # TODO(synk): the data-dependent embedding-row gather stays in plain JAX/XLA;
        # it has no cheap rectangular BlockSpec equivalent at these sizes.
        B = x.shape[0]
        x_emb = self.emb_table[x + self.offsets[None, :]]              # (B, F, D) compute dtype
        x2 = x_emb.reshape(B, self.num_field * self.embed_dim)         # (B, F*D), no extra cast
        return fmfm_interaction(x2, self.w_full, batch_tile=self.batch_tile)

    def reference(self, x):
        """Pure-JAX reference matching the PyTorch forward exactly (f32 math)."""
        emb = self.emb_table.astype(jnp.float32)
        x_emb = emb[x + self.offsets[None, :]]                         # (B, F, D)
        left = x_emb[:, self.row]                                      # (B, P, D)
        right = x_emb[:, self.col]                                     # (B, P, D)
        left = jnp.einsum("bpd,pde->bpe", left, self.interaction_weight)
        return jnp.sum(left * right, axis=(-1, -2))[:, None]


if __name__ == "__main__":
    field_dims = [4, 5, 6, 7]   # 4 fields -> 6 pair interactions
    embed_dim = 32              # F*D = 128 -> exactly one lane-aligned MXU pass
    batch = 2

    key = jax.random.PRNGKey(0)
    k_model, k_x = jax.random.split(key)

    def make_inputs(base_key, B):
        cols = []
        for f, fd in enumerate(field_dims):
            cols.append(jax.random.randint(
                jax.random.fold_in(base_key, f), (B,), 0, fd, jnp.int32))
        return jnp.stack(cols, axis=1)   # (B, F)

    x = make_inputs(k_x, batch)

    # 1) Exactness check with f32 kernel inputs (tight tolerance vs. reference).
    model_f32 = FMFM(field_dims, embed_dim, k_model, compute_dtype=jnp.float32)
    ref = model_f32.reference(x)
    out_f32 = jax.block_until_ready(model_f32(x))
    assert out_f32.shape == (batch, 1)
    np.testing.assert_allclose(np.asarray(out_f32), np.asarray(ref), rtol=1e-4, atol=1e-4)

    # 2) Multi-tile path (batch split into >=2 tiles, row padding, lane-dense output
    #    blocks): still small, exercises the grid / padding logic end to end.
    x_big = make_inputs(jax.random.fold_in(k_x, 1234), 384)
    ref_big = model_f32.reference(x_big)
    out_big = jax.block_until_ready(model_f32(x_big))
    assert out_big.shape == (384, 1)
    np.testing.assert_allclose(np.asarray(out_big), np.asarray(ref_big), rtol=1e-4, atol=1e-4)

    # 3) Performance path: bf16 table/weights, f32 accumulation (looser tolerance).
    model_bf16 = FMFM(field_dims, embed_dim, k_model, compute_dtype=jnp.bfloat16)
    out_bf16 = jax.block_until_ready(model_bf16(x))
    assert out_bf16.shape == (batch, 1)
    np.testing.assert_allclose(np.asarray(out_bf16), np.asarray(ref), rtol=5e-2, atol=5e-2)

    print("KERNEL_OK")
</pallas_src>

<mosaic_0001>
module attributes {stable_mosaic.version = 11 : i64} {
  func.func @_fmfm_kernel(%arg0: i32, %arg1: memref<2x128xf32, #tpu.memory_space<vmem>>, %arg2: memref<128x128xf32, #tpu.memory_space<vmem>>, %arg3: memref<8x2xf32, #tpu.memory_space<vmem>>) attributes {dimension_semantics = [#tpu.dimension_semantics<parallel>], iteration_bounds = array<i64: 1>, scalar_prefetch = 0 : i64, scratch_operands = 0 : i64, tpu.core_type = #tpu.core_type<tc>, window_params = [{transform_indices = @transform_0, window_bounds = array<i64: 2, 128>}, {pipeline_mode = #tpu.pipeline_mode<synchronous>, transform_indices = @transform_1, window_bounds = array<i64: 128, 128>}, {transform_indices = @transform_2, window_bounds = array<i64: 8, 2>}]} {
    %c0 = arith.constant 0 : index
    %c0_0 = arith.constant 0 : index
    %0 = vector.load %arg1[%c0, %c0_0] : memref<2x128xf32, #tpu.memory_space<vmem>>, vector<2x128xf32>
    %c0_1 = arith.constant 0 : index
    %c0_2 = arith.constant 0 : index
    %1 = vector.load %arg2[%c0_1, %c0_2] : memref<128x128xf32, #tpu.memory_space<vmem>>, vector<128x128xf32>
    %cst = arith.constant dense<0.000000e+00> : vector<2x128xf32>
    %2 = tpu.matmul %0, %1, %cst {dimension_numbers = #tpu.dot_dimension_numbers<[1], [0], [0], [1], [0, 0, 1, 1], [], []>} : vector<2x128xf32>, vector<128x128xf32>, vector<2x128xf32> -> vector<2x128xf32>
    %3 = arith.mulf %2, %0 : vector<2x128xf32>
    %cst_3 = arith.constant dense<0.000000e+00> : vector<2xf32>
    %4 = vector.multi_reduction <add>, %3, %cst_3 [1] : vector<2x128xf32> to vector<2xf32>
    %5 = vector.shape_cast %4 : vector<2xf32> to vector<1x2xf32>
    %6 = vector.shape_cast %5 : vector<1x2xf32> to vector<1x2xf32>
    %7 = vector.broadcast %6 : vector<1x2xf32> to vector<8x2xf32>
    %c0_4 = arith.constant 0 : index
    %c0_5 = arith.constant 0 : index
    %8 = vector.load %arg3[%c0_4, %c0_5] : memref<8x2xf32, #tpu.memory_space<vmem>>, vector<8x2xf32>
    tpu.vector_store %arg3[%c0_4, %c0_5], %7 {strides = array<i32>} : memref<8x2xf32, #tpu.memory_space<vmem>>, vector<8x2xf32>,
    return
  }
  func.func @transform_0(%arg0: i32) -> (i32, i32) {
    %c0_i32 = arith.constant 0 : i32
    %c0_i32_0 = arith.constant 0 : i32
    return %arg0, %c0_i32 : i32, i32
  }
  func.func @transform_1(%arg0: i32) -> (i32, i32) {
    %c0_i32 = arith.constant 0 : i32
    %c0_i32_0 = arith.constant 0 : i32
    %c0_i32_1 = arith.constant 0 : i32
    return %c0_i32, %c0_i32_0 : i32, i32
  }
  func.func @transform_2(%arg0: i32) -> (i32, i32) {
    %c0_i32 = arith.constant 0 : i32
    %c0_i32_0 = arith.constant 0 : i32
    return %c0_i32, %arg0 : i32, i32
  }
}

</mosaic_0001>

<llo_original>
// kernel: tpu_custom_call.1
$region0: #{tpu_custom_call.1}
  #allocation0 [shape = 'u32[]', space=smem, size = 0x4, offset = 0x4, fixed_abs, tag = 'smem constant byte address 0x4 - core index']
  #allocation1 [shape = 'u32[72,128]{1,0:T(1,128)}', space=vmem, size = 0x9000, scoped, tag = 'internal scratch']
  %s0 = inlined_call_operand.hbm [shape: f32[2,128], index: 0, kind: input, shape index: {}]
  %s1 = inlined_call_operand.hbm [shape: f32[128,128], index: 1, kind: input, shape index: {}]
  %s2 = inlined_call_operand.vmem [shape: f32[8,2], index: 2, kind: output, shape index: {}]
  %s3 = sld [smem:[#allocation0]]
  $region26: #{tpu_custom_call.1} parent=0
    _
  %s5 = ssub.s32 1, %s3
  %s6 = scalar_select 0, %s5, %s3
  $region1: #{tpu_custom_call.1} parent=0
    #allocation2 [shape = 'u8[1024]{0}', space=vmem, size = 0x400, scoped, tag = 'input window, operand 0, single buffered']
    #allocation3 [shape = 's32[1]{0}', space=sflag, size = 0x4, scoped, tag = 'scoped memory for tpu_custom_call.1']
    #allocation4 [shape = 'u8[65536]{0}', space=vmem, size = 0x10000, scoped, tag = 'input window, operand 1, single buffered']
    #allocation5 [shape = 's32[1]{0}', space=sflag, size = 0x4, scoped, tag = 'scoped memory for tpu_custom_call.1']
    %7 = vsyncpa [#allocation3], 0
    %8 = vsyncpa [#allocation5], 0
    // Predicated region
    $region2: #{tpu_custom_call.1} parent=1 // pred_check
      _
    $region3: #{tpu_custom_call.1} parent=1 // pred_check_branch
      %10 = sbr.rel (0) target = $region5
    $region4: #{tpu_custom_call.1} parent=1 // pred_region
      %12 = vsyncadd [#allocation3], 0
      %s14 = sshll.u32 %s0, 4
      %s15 = int_to_ptr.hbm [resolvable:$true] %s14
      %s16 = sshll.u32 [#allocation2], 4
      %s17 = int_to_ptr.vmem [resolvable:$true] %s16
      %19 = dma.hbm_to_vmem [thread:$0]  %s15, 32, %s17, [#allocation3]
    $region5: #{tpu_custom_call.1} parent=1 // pred_fallthru
      _
    // Predicated region
    $region6: #{tpu_custom_call.1} parent=1 // pred_check
      _
    $region7: #{tpu_custom_call.1} parent=1 // pred_check_branch
      %21 = sbr.rel (0) target = $region9
    $region8: #{tpu_custom_call.1} parent=1 // pred_region
      %23 = vsyncadd [#allocation5], 0
      %s24 = sshll.u32 %s1, 4
      %s25 = int_to_ptr.hbm [resolvable:$true] %s24
      %s26 = sshll.u32 [#allocation4], 4
      %s27 = int_to_ptr.vmem [resolvable:$true] %s26
      %32 = dma.hbm_to_vmem [thread:$0]  %s25, 2048, %s27, [#allocation5], 128, 128, 8
    $region9: #{tpu_custom_call.1} parent=1 // pred_fallthru
      _
    // Predicated region
    $region10: #{tpu_custom_call.1} parent=1 // pred_check
      _
    $region11: #{tpu_custom_call.1} parent=1 // pred_check_branch
      %34 = sbr.rel (0) target = $region13
    $region12: #{tpu_custom_call.1} parent=1 // pred_region
      %36 = dma.done [#allocation3], 32
    $region13: #{tpu_custom_call.1} parent=1 // pred_fallthru
      _
    // Predicated region
    $region14: #{tpu_custom_call.1} parent=1 // pred_check
      _
    $region15: #{tpu_custom_call.1} parent=1 // pred_check_branch
      %38 = sbr.rel (0) target = $region17
    $region16: #{tpu_custom_call.1} parent=1 // pred_region
      %40 = dma.done [#allocation5], 2048
    $region17: #{tpu_custom_call.1} parent=1 // pred_fallthru
      _
    %v41 = vld [vmem:[#allocation2] sm:$0x3]
    %v42 = vld [vmem:[#allocation4] sm:$0xff]
    %v43 = vld [vmem:[#allocation4 + $0x8] sm:$0xff]
    %v44 = vld [vmem:[#allocation4 + $0x10] sm:$0xff]
    %v45 = vld [vmem:[#allocation4 + $0x18] sm:$0xff]
    %v46 = vld [vmem:[#allocation4 + $0x20] sm:$0xff]
    %v47 = vld [vmem:[#allocation4 + $0x28] sm:$0xff]
    %v48 = vld [vmem:[#allocation4 + $0x30] sm:$0xff]
    %v49 = vld [vmem:[#allocation4 + $0x38] sm:$0xff]
    %v50 = vld [vmem:[#allocation4 + $0x40] sm:$0xff]
    %v51 = vld [vmem:[#allocation4 + $0x48] sm:$0xff]
    %v52 = vld [vmem:[#allocation4 + $0x50] sm:$0xff]
    %v53 = vld [vmem:[#allocation4 + $0x58] sm:$0xff]
    %v54 = vld [vmem:[#allocation4 + $0x60] sm:$0xff]
    %v55 = vld [vmem:[#allocation4 + $0x68] sm:$0xff]
    %v56 = vld [vmem:[#allocation4 + $0x70] sm:$0xff]
    %v57 = vld [vmem:[#allocation4 + $0x78] sm:$0xff]
    %58 = vmatpush.msra.mxu0 %v57
    %59 = vmatpush.msra.mxu0 %v56
    %60 = vmatpush.msra.mxu0 %v55
    %61 = vmatpush.msra.mxu0 %v54
    %62 = vmatpush.msra.mxu0 %v53
    %63 = vmatpush.msra.mxu0 %v52
    %64 = vmatpush.msra.mxu0 %v51
    %65 = vmatpush.msra.mxu0 %v50
    %66 = vmatpush.msra.mxu0 %v49
    %67 = vmatpush.msra.mxu0 %v48
    %68 = vmatpush.msra.mxu0 %v47
    %69 = vmatpush.msra.mxu0 %v46
    %70 = vmatpush.msra.mxu0 %v45
    %71 = vmatpush.msra.mxu0 %v44
    %72 = vmatpush.msra.mxu0 %v43
    %73 = vmatpush.msra.mxu0 %v42
    %74 = vmatmul.f32.gmra.mxu0 %v41
    %v75 = vpop.f32.mrf.mxu0
    %v76 = vadd.f32 0.0, %v75
    %77 = vdwg.mxu0
    %v78 = vmul.f32 %v76, %v41
    %vm79 = vcmask 1041408
    %v80 = vsel %vm79, %v78, 0.0
    %81 = vadd.xlane.f32.xlu0 %v80
    %v82 = vpop.xlane.xlu0 %81
    %v84 = vlaneseq
    %v85 = vand.u32 %v84, 127
    %v86 = vperm.slane %v82, %v85
    %vm87 = vcmask 1042434
    %v88 = vsel %vm87, %v86, %v86
    %vm89 = vcmask 1043459
    %v90 = vsel %vm89, %v86, %v88
    %vm91 = vcmask 1044484
    %v92 = vsel %vm91, %v86, %v90
    %vm93 = vcmask 1045509
    %v94 = vsel %vm93, %v86, %v92
    %vm95 = vcmask 1046534
    %v96 = vsel %vm95, %v86, %v94
    %vm97 = vcmask 1047559
    %v98 = vsel %vm97, %v86, %v96
    %vm100 = vcmask 15360
    %101 = vst.msk [vmem:[%s2] sm:$0xff] %vm100, %v98
    // Predicated region
    $region18: #{tpu_custom_call.1} parent=1 // pred_check
      _
    $region19: #{tpu_custom_call.1} parent=1 // pred_check_branch
      %103 = sbr.rel (0) target = $region21
    $region20: #{tpu_custom_call.1} parent=1 // pred_region
      _
    $region21: #{tpu_custom_call.1} parent=1 // pred_fallthru
      _
    // Predicated region
    $region22: #{tpu_custom_call.1} parent=1 // pred_check
      _
    $region23: #{tpu_custom_call.1} parent=1 // pred_check_branch
      %105 = sbr.rel (0) target = $region25
    $region24: #{tpu_custom_call.1} parent=1 // pred_region
      _
    $region25: #{tpu_custom_call.1} parent=1 // pred_fallthru
      _
    %106 = vsyncpa [#allocation3], 1
    %107 = vsyncpa [#allocation5], 1

</llo_original>
